<compile_context>
chip_gen: v5e
topology: v5e:2x2
jax: 0.10.0
libtpu: 0.0.40
codegen_flags: <defaults>
</compile_context>

<pallas_src>
import inspect

import numpy as np
import jax
import jax.numpy as jnp
from jax.experimental import pallas as pl
from jax.experimental.pallas import tpu as pltpu


def _round_up(n: int, m: int) -> int:
    return (n + m - 1) // m * m


# ---------------------------------------------------------------------------
# Kernel body
# ---------------------------------------------------------------------------
def basic_block_kernel(x_ref, w1t_ref, b1_ref, w2t_ref, b2_ref, o_ref):
    # x_ref: (TB, Pp) in the caller's dtype (f32); w*t_ref: (Pp, Pp) pre-transposed
    # MXU-dtype weights; b*_ref: (1, Pp) f32; o_ref: (TB, Pp) output dtype.
    x = x_ref[...]                                           # f32 tile, read once
    h = jnp.dot(x.astype(w1t_ref.dtype), w1t_ref[...],
                preferred_element_type=jnp.float32)
    h = jnp.maximum(h + b1_ref[...], 0.0)                    # bias + ReLU in f32
    y = jnp.dot(h.astype(w2t_ref.dtype), w2t_ref[...],
                preferred_element_type=jnp.float32)
    # Residual uses the exact f32 x tile (matches PyTorch: out += identity).
    y = jnp.maximum(y + b2_ref[...] + x.astype(jnp.float32), 0.0)
    o_ref[...] = y.astype(o_ref.dtype)


# ---------------------------------------------------------------------------
# One-time parameter prep (transpose + lane-pad + cast). Do NOT re-run per step.
# ---------------------------------------------------------------------------
def prepare_params(w1, b1, w2, b2, mxu_dtype=jnp.bfloat16):
    P = w1.shape[0]
    Pp = _round_up(P, 128)                                   # lane-dense feature axis

    def pad2(a):
        return jnp.pad(a, ((0, Pp - a.shape[0]), (0, Pp - a.shape[1])))

    w1t = pad2(w1.T).astype(mxu_dtype)                       # (in, out), zero-padded
    w2t = pad2(w2.T).astype(mxu_dtype)
    b1r = jnp.pad(b1, (0, Pp - P)).reshape(1, Pp).astype(jnp.float32)
    b2r = jnp.pad(b2, (0, Pp - P)).reshape(1, Pp).astype(jnp.float32)
    return (w1t, b1r, w2t, b2r)


# ---------------------------------------------------------------------------
# Generation-aware sizing
# ---------------------------------------------------------------------------
def _vmem_cap_bytes() -> int:
    # Query the chip; fall back to the smallest (v7x, 64 MiB) if the query is
    # unavailable so sizing is always safe.
    try:
        cap = int(pltpu.get_tpu_info().vmem_capacity_bytes)
        if cap > 0:
            return cap
    except Exception:  # info query only -- never affects correctness
        pass
    return 64 * 1024 * 1024


def _choose_tile_b(B: int, Pp: int, mxu_bytes: int, out_bytes: int,
                   vmem_cap: int) -> int:
    # Activation VMEM budget = capacity - resident weights - compiler headroom.
    weights = 2 * Pp * Pp * mxu_bytes + 2 * Pp * 4
    act_budget = max(4 << 20, vmem_cap - weights - (8 << 20))
    # Per batch row: double-buffered f32 input tile + double-buffered output tile.
    per_row = 2 * Pp * 4 + 2 * Pp * out_bytes
    cap_rows = max(8, (act_budget // per_row) // 8 * 8)
    max_tile = 2048 if vmem_cap > (96 << 20) else 1024       # bigger tiles on 128 MiB chips
    cap_rows = min(cap_rows, max_tile)

    rows8 = _round_up(B, 8)
    nsteps = max(1, pl.cdiv(rows8, cap_rows))                # steps forced by VMEM
    if rows8 > 8:
        nsteps = max(nsteps, min(4, rows8 // 8))             # >= 4: both v7x TCs get >= 2 steps
    if nsteps > 1 and nsteps % 2 == 1:
        nsteps += 1                                          # even split across the 2 TCs
    tile = max(8, _round_up(pl.cdiv(B, nsteps), 8))
    return min(tile, cap_rows, rows8)


def _vmem_limit_bytes(tile_b: int, Pp: int, mxu_bytes: int, out_bytes: int,
                      vmem_cap: int) -> int:
    acts = 2 * tile_b * Pp * 4 + 2 * tile_b * Pp * out_bytes
    weights = 2 * Pp * Pp * mxu_bytes + 2 * 2 * Pp * 4
    est = acts + weights + (2 << 20)
    cap = vmem_cap - (8 << 20)                               # headroom for Mosaic scratch
    return int(min(max(int(1.5 * est), 32 << 20), cap))


# ---------------------------------------------------------------------------
# pipeline_mode feature detection (no broad except around the real call)
# ---------------------------------------------------------------------------
def _detect_weight_pipeline_mode():
    if not hasattr(pl, "Buffered"):
        return None
    try:
        params = inspect.signature(pl.BlockSpec).parameters
        if "pipeline_mode" not in params:
            return None
    except (TypeError, ValueError):
        pass  # cannot introspect -- try constructing anyway
    try:
        return pl.Buffered(1)                                # single VMEM copy of weights
    except (TypeError, ValueError):
        return None


_WEIGHT_MODE = _detect_weight_pipeline_mode()


def _build_call(Bp, Pp, tile_b, out_dtype, vmem_limit, weight_mode):
    resident = {} if weight_mode is None else dict(pipeline_mode=weight_mode)
    return pl.pallas_call(
        basic_block_kernel,
        out_shape=jax.ShapeDtypeStruct((Bp, Pp), out_dtype),
        grid_spec=pltpu.PrefetchScalarGridSpec(
            num_scalar_prefetch=0,
            grid=(Bp // tile_b,),
            in_specs=[
                pl.BlockSpec((tile_b, Pp), lambda i: (i, 0)),          # x tile (pipelined)
                pl.BlockSpec((Pp, Pp), lambda i: (0, 0), **resident),  # W1^T (resident)
                pl.BlockSpec((1, Pp), lambda i: (0, 0), **resident),   # b1
                pl.BlockSpec((Pp, Pp), lambda i: (0, 0), **resident),  # W2^T (resident)
                pl.BlockSpec((1, Pp), lambda i: (0, 0), **resident),   # b2
            ],
            out_specs=pl.BlockSpec((tile_b, Pp), lambda i: (i, 0)),
        ),
        compiler_params=pltpu.CompilerParams(
            dimension_semantics=("parallel",),
            vmem_limit_bytes=vmem_limit,
        ),
    )


# ---------------------------------------------------------------------------
# Wrapper
# ---------------------------------------------------------------------------
def basic_block(x, params, *, tile_b=None, out_dtype=None):
    """x: (B, planes); params: output of prepare_params(). Returns (B, planes)."""
    w1t, b1r, w2t, b2r = params
    B, P = x.shape
    Pp = w1t.shape[0]
    mxu_bytes = np.dtype(w1t.dtype).itemsize
    if out_dtype is None:
        out_dtype = w1t.dtype            # bf16 output on the fast path halves writeback
    out_bytes = np.dtype(jnp.dtype(out_dtype)).itemsize
    vmem_cap = _vmem_cap_bytes()

    if tile_b is None:
        tile_b = _choose_tile_b(B, Pp, mxu_bytes, out_bytes, vmem_cap)
    if tile_b % 8 != 0:
        raise ValueError("tile_b must be a multiple of 8 (sublane packing)")

    Bp = _round_up(B, tile_b)
    # Keep x in its original dtype; pad only if actually misaligned.
    x_in = x if (Bp, Pp) == (B, P) else jnp.pad(x, ((0, Bp - B), (0, Pp - P)))

    vmem_limit = _vmem_limit_bytes(tile_b, Pp, mxu_bytes, out_bytes, vmem_cap)

    narrow_errs = (TypeError, ValueError, NotImplementedError, pltpu.LoweringException)
    if _WEIGHT_MODE is not None:
        try:
            out = _build_call(Bp, Pp, tile_b, out_dtype, vmem_limit,
                              _WEIGHT_MODE)(x_in, w1t, b1r, w2t, b2r)
        except narrow_errs:
            # Only spec/lowering rejections of Buffered(1) land here; OOM and real
            # runtime errors propagate to the caller unchanged.
            out = _build_call(Bp, Pp, tile_b, out_dtype, vmem_limit,
                              None)(x_in, w1t, b1r, w2t, b2r)
    else:
        out = _build_call(Bp, Pp, tile_b, out_dtype, vmem_limit,
                          None)(x_in, w1t, b1r, w2t, b2r)

    if (Bp, Pp) != (B, P):
        out = out[:B, :P]
    return out


def basic_block_ref(x, w1, b1, w2, b2):
    out = jnp.maximum(x @ w1.T + b1, 0.0)
    out = out @ w2.T + b2
    return jnp.maximum(out + x, 0.0)


if __name__ == "__main__":
    key = jax.random.PRNGKey(0)
    planes = 32
    batch = 16

    k_x, k_w1, k_b1, k_w2, k_b2 = jax.random.split(key, 5)
    bound = 1.0 / (planes ** 0.5)
    x = jax.random.normal(k_x, (batch, planes), dtype=jnp.float32)
    w1 = jax.random.uniform(k_w1, (planes, planes), minval=-bound, maxval=bound, dtype=jnp.float32)
    b1 = jax.random.uniform(k_b1, (planes,), minval=-bound, maxval=bound, dtype=jnp.float32)
    w2 = jax.random.uniform(k_w2, (planes, planes), minval=-bound, maxval=bound, dtype=jnp.float32)
    b2 = jax.random.uniform(k_b2, (planes,), minval=-bound, maxval=bound, dtype=jnp.float32)

    ref = basic_block_ref(x, w1, b1, w2, b2)

    # Exact path: f32 MXU operands + f32 output, tight tolerance vs the reference.
    params_f32 = prepare_params(w1, b1, w2, b2, mxu_dtype=jnp.float32)
    out_f32 = jax.block_until_ready(basic_block(x, params_f32))
    assert out_f32.shape == ref.shape == (batch, planes)
    assert jnp.allclose(out_f32, ref, atol=1e-5, rtol=1e-5), "f32 kernel mismatch vs reference"

    # Fast path: bf16 MXU operands (f32 accumulation, exact f32 residual), bf16 output.
    params_bf16 = prepare_params(w1, b1, w2, b2)
    out_bf16 = jax.block_until_ready(basic_block(x, params_bf16))
    assert out_bf16.shape == ref.shape
    assert out_bf16.dtype == jnp.bfloat16
    assert jnp.allclose(out_bf16.astype(jnp.float32), ref, atol=5e-2, rtol=5e-2), \
        "bf16 kernel mismatch vs reference"

    print("KERNEL_OK")
</pallas_src>

<mosaic_0001>
module attributes {stable_mosaic.version = 11 : i64} {
  func.func @basic_block_kernel(%arg0: i32, %arg1: memref<8x128xf32, #tpu.memory_space<vmem>>, %arg2: memref<128x128xf32, #tpu.memory_space<vmem>>, %arg3: memref<1x128xf32, #tpu.memory_space<vmem>>, %arg4: memref<128x128xf32, #tpu.memory_space<vmem>>, %arg5: memref<1x128xf32, #tpu.memory_space<vmem>>, %arg6: memref<8x128xf32, #tpu.memory_space<vmem>>) attributes {dimension_semantics = [#tpu.dimension_semantics<parallel>], iteration_bounds = array<i64: 2>, scalar_prefetch = 0 : i64, scratch_operands = 0 : i64, tpu.core_type = #tpu.core_type<tc>, window_params = [{transform_indices = @transform_0, window_bounds = array<i64: 8, 128>}, {pipeline_mode = #tpu.pipeline_mode<synchronous>, transform_indices = @transform_1, window_bounds = array<i64: 128, 128>}, {pipeline_mode = #tpu.pipeline_mode<synchronous>, transform_indices = @transform_2, window_bounds = array<i64: 1, 128>}, {pipeline_mode = #tpu.pipeline_mode<synchronous>, transform_indices = @transform_3, window_bounds = array<i64: 128, 128>}, {pipeline_mode = #tpu.pipeline_mode<synchronous>, transform_indices = @transform_4, window_bounds = array<i64: 1, 128>}, {transform_indices = @transform_5, window_bounds = array<i64: 8, 128>}]} {
    %c0 = arith.constant 0 : index
    %c0_0 = arith.constant 0 : index
    %0 = vector.load %arg1[%c0, %c0_0] : memref<8x128xf32, #tpu.memory_space<vmem>>, vector<8x128xf32>
    %c0_1 = arith.constant 0 : index
    %c0_2 = arith.constant 0 : index
    %1 = vector.load %arg2[%c0_1, %c0_2] : memref<128x128xf32, #tpu.memory_space<vmem>>, vector<128x128xf32>
    %cst = arith.constant dense<0.000000e+00> : vector<8x128xf32>
    %2 = tpu.matmul %0, %1, %cst {dimension_numbers = #tpu.dot_dimension_numbers<[1], [0], [0], [1], [0, 0, 1, 1], [], []>} : vector<8x128xf32>, vector<128x128xf32>, vector<8x128xf32> -> vector<8x128xf32>
    %c0_3 = arith.constant 0 : index
    %c0_4 = arith.constant 0 : index
    %3 = vector.load %arg3[%c0_3, %c0_4] : memref<1x128xf32, #tpu.memory_space<vmem>>, vector<1x128xf32>
    %4 = vector.broadcast %3 : vector<1x128xf32> to vector<8x128xf32>
    %5 = arith.addf %2, %4 : vector<8x128xf32>
    %cst_5 = arith.constant 0.000000e+00 : f32
    %6 = vector.broadcast %cst_5 : f32 to vector<8x128xf32>
    %7 = arith.maximumf %5, %6 : vector<8x128xf32>
    %c0_6 = arith.constant 0 : index
    %c0_7 = arith.constant 0 : index
    %8 = vector.load %arg4[%c0_6, %c0_7] : memref<128x128xf32, #tpu.memory_space<vmem>>, vector<128x128xf32>
    %cst_8 = arith.constant dense<0.000000e+00> : vector<8x128xf32>
    %9 = tpu.matmul %7, %8, %cst_8 {dimension_numbers = #tpu.dot_dimension_numbers<[1], [0], [0], [1], [0, 0, 1, 1], [], []>} : vector<8x128xf32>, vector<128x128xf32>, vector<8x128xf32> -> vector<8x128xf32>
    %c0_9 = arith.constant 0 : index
    %c0_10 = arith.constant 0 : index
    %10 = vector.load %arg5[%c0_9, %c0_10] : memref<1x128xf32, #tpu.memory_space<vmem>>, vector<1x128xf32>
    %11 = vector.broadcast %10 : vector<1x128xf32> to vector<8x128xf32>
    %12 = arith.addf %9, %11 : vector<8x128xf32>
    %13 = arith.addf %12, %0 : vector<8x128xf32>
    %cst_11 = arith.constant 0.000000e+00 : f32
    %14 = vector.broadcast %cst_11 : f32 to vector<8x128xf32>
    %15 = arith.maximumf %13, %14 : vector<8x128xf32>
    %c0_12 = arith.constant 0 : index
    %c0_13 = arith.constant 0 : index
    %16 = vector.load %arg6[%c0_12, %c0_13] : memref<8x128xf32, #tpu.memory_space<vmem>>, vector<8x128xf32>
    tpu.vector_store %arg6[%c0_12, %c0_13], %15 {strides = array<i32>} : memref<8x128xf32, #tpu.memory_space<vmem>>, vector<8x128xf32>,
    return
  }
  func.func @transform_0(%arg0: i32) -> (i32, i32) {
    %c0_i32 = arith.constant 0 : i32
    %c0_i32_0 = arith.constant 0 : i32
    return %arg0, %c0_i32 : i32, i32
  }
  func.func @transform_1(%arg0: i32) -> (i32, i32) {
    %c0_i32 = arith.constant 0 : i32
    %c0_i32_0 = arith.constant 0 : i32
    %c0_i32_1 = arith.constant 0 : i32
    return %c0_i32, %c0_i32_0 : i32, i32
  }
  func.func @transform_2(%arg0: i32) -> (i32, i32) {
    %c0_i32 = arith.constant 0 : i32
    %c0_i32_0 = arith.constant 0 : i32
    %c0_i32_1 = arith.constant 0 : i32
    return %c0_i32, %c0_i32_0 : i32, i32
  }
  func.func @transform_3(%arg0: i32) -> (i32, i32) {
    %c0_i32 = arith.constant 0 : i32
    %c0_i32_0 = arith.constant 0 : i32
    %c0_i32_1 = arith.constant 0 : i32
    return %c0_i32, %c0_i32_0 : i32, i32
  }
  func.func @transform_4(%arg0: i32) -> (i32, i32) {
    %c0_i32 = arith.constant 0 : i32
    %c0_i32_0 = arith.constant 0 : i32
    %c0_i32_1 = arith.constant 0 : i32
    return %c0_i32, %c0_i32_0 : i32, i32
  }
  func.func @transform_5(%arg0: i32) -> (i32, i32) {
    %c0_i32 = arith.constant 0 : i32
    %c0_i32_0 = arith.constant 0 : i32
    return %arg0, %c0_i32 : i32, i32
  }
}

</mosaic_0001>

<llo_original>
// kernel: tpu_custom_call.1
$region0: #{tpu_custom_call.1}
  #allocation0 [shape = 'u32[]', space=smem, size = 0x4, offset = 0x4, fixed_abs, tag = 'smem constant byte address 0x4 - core index']
  #allocation1 [shape = 'u32[72,128]{1,0:T(1,128)}', space=vmem, size = 0x9000, scoped, tag = 'internal scratch']
  %s0 = inlined_call_operand.hbm [shape: f32[16,128], index: 0, kind: input, shape index: {}]
  %s1 = inlined_call_operand.hbm [shape: f32[128,128], index: 1, kind: input, shape index: {}]
  %s2 = inlined_call_operand.vmem [shape: f32[1,128], index: 2, kind: input, shape index: {}]
  %s3 = inlined_call_operand.hbm [shape: f32[128,128], index: 3, kind: input, shape index: {}]
  %s4 = inlined_call_operand.vmem [shape: f32[1,128], index: 4, kind: input, shape index: {}]
  %s5 = inlined_call_operand.hbm [shape: f32[16,128], index: 5, kind: output, shape index: {}]
  %s6 = sld [smem:[#allocation0]]
  $region65: #{tpu_custom_call.1} parent=0
    _
  %s8 = ssub.s32 1, %s6
  %s9 = scalar_select 0, %s8, %s6
  $region1: #{tpu_custom_call.1} parent=0
    #allocation2 [shape = 'u8[8192]{0}', space=vmem, size = 0x2000, scoped, tag = 'input window, operand 0']
    #allocation3 [shape = 's32[2]{0}', space=sflag, size = 0x8, scoped, tag = 'scoped memory for tpu_custom_call.1']
    #allocation4 [shape = 's32[2]{0}', space=sflag, size = 0x8, scoped, tag = 'scoped memory for tpu_custom_call.1']
    #allocation5 [shape = 'u8[65536]{0}', space=vmem, size = 0x10000, scoped, tag = 'input window, operand 1, single buffered']
    #allocation6 [shape = 's32[1]{0}', space=sflag, size = 0x4, scoped, tag = 'scoped memory for tpu_custom_call.1']
    #allocation7 [shape = 'u8[65536]{0}', space=vmem, size = 0x10000, scoped, tag = 'input window, operand 3, single buffered']
    #allocation8 [shape = 'u8[8192]{0}', space=vmem, size = 0x2000, scoped, tag = 'output window, operand 0']
    %10 = vsyncpa [#allocation3], 0
    %s11 = scalar_lea.sflag [#allocation3], 1
    %12 = vsyncpa %s11, 0
    %13 = vsyncpa [#allocation6], 0
    %14 = vsyncpa [#allocation4], 0
    %s15 = scalar_lea.sflag [#allocation4], 1
    %16 = vsyncpa %s15, 0
    loop: start=0, step=1, limit=4
    $region2: #{tpu_custom_call.1} parent=1 // loop_pre_header
      _
    $region3: #{tpu_custom_call.1} parent=1 // loop_header
      %s18 = sphi 0, %s22
      %p19 = scmp.ge.s32.totalorder %s18, 4
      %s28 = sphi 0, %s30
      %s31 = sphi 0, %s28
      %s32 = sphi 0, %s31
      %s48 = sphi 0, %s32
      %s52 = sphi 0, %s52
      %s54 = sphi 0, %s52
      %s55 = sphi 0, %s54
      %s69 = sphi 0, %s55
      %s73 = sphi 0, %s73
      %s75 = sphi 0, %s73
      %s76 = sphi 0, %s75
      %s90 = sphi 0, %s76
      %s94 = sphi 0, %s94
      %s96 = sphi 0, %s94
      %s97 = sphi 0, %s96
      %s111 = sphi 0, %s97
      %s115 = sphi 0, %s115
      %s117 = sphi 0, %s115
      %s118 = sphi 0, %s117
      %s132 = sphi 0, %s118
      %s138 = sphi 0, %s140
      %s141 = sphi 0, %s138
      %s142 = sphi 0, %s141
      %s158 = sphi 0, %s142
    $region4: #{tpu_custom_call.1} parent=1 // loop_header_branch
      %21 = sbr.rel (%p19) target = $region8
    $region5: #{tpu_custom_call.1} parent=1 // loop_body
      %s23 = ssub.s32 %s18, 1
      %s24 = ssub.s32 %s18, 2
      %s25 = sadd.s32 %s18, 1
      %s26 = ssub.s32 %s18, %s25
      %p27 = scmp.eq.s32.totalorder %s26, 0
      %s29 = sadd.s32 %s28, 1
      %s30 = scalar_select %p27, %s28, %s29
      %p33 = pneg %p27
      %p34 = scmp.eq.s32.totalorder %s18, 1
      %p35 = por %p33, %p34
      %p36 = scmp.ne.s32.totalorder %s28, %s31
      %p37 = scmp.eq.s32.totalorder %s18, 0
      %p38 = por %p36, %p37
      %p39 = scmp.ne.s32.totalorder %s28, %s31
      %p40 = scmp.eq.s32.totalorder %s23, 1
      %p41 = por %p39, %p40
      %p42 = scmp.ne.s32.totalorder %s31, %s32
      %p43 = scmp.eq.s32.totalorder %s23, 0
      %p44 = por %p42, %p43
      %p45 = scmp.ne.s32.totalorder %s31, %s32
      %p46 = scmp.eq.s32.totalorder %s24, 1
      %p47 = por %p45, %p46
      %p49 = scmp.ne.s32.totalorder %s32, %s48
      %p50 = scmp.eq.s32.totalorder %s24, 0
      %p51 = por %p49, %p50
      %s53 = sadd.s32 %s52, 1
      %p56 = scmp.eq.s32.totalorder %s18, 1
      %p57 = scmp.ne.s32.totalorder %s52, %s54
      %p58 = scmp.eq.s32.totalorder %s18, 0
      %p59 = por %p57, %p58
      %p60 = scmp.ne.s32.totalorder %s52, %s54
      %p61 = scmp.eq.s32.totalorder %s23, 1
      %p62 = por %p60, %p61
      %p63 = scmp.ne.s32.totalorder %s54, %s55
      %p64 = scmp.eq.s32.totalorder %s23, 0
      %p65 = por %p63, %p64
      %p66 = scmp.ne.s32.totalorder %s54, %s55
      %p67 = scmp.eq.s32.totalorder %s24, 1
      %p68 = por %p66, %p67
      %p70 = scmp.ne.s32.totalorder %s55, %s69
      %p71 = scmp.eq.s32.totalorder %s24, 0
      %p72 = por %p70, %p71
      %s74 = sadd.s32 %s73, 1
      %p77 = scmp.eq.s32.totalorder %s18, 1
      %p78 = scmp.ne.s32.totalorder %s73, %s75
      %p79 = scmp.eq.s32.totalorder %s18, 0
      %p80 = por %p78, %p79
      %p81 = scmp.ne.s32.totalorder %s73, %s75
      %p82 = scmp.eq.s32.totalorder %s23, 1
      %p83 = por %p81, %p82
      %p84 = scmp.ne.s32.totalorder %s75, %s76
      %p85 = scmp.eq.s32.totalorder %s23, 0
      %p86 = por %p84, %p85
      %p87 = scmp.ne.s32.totalorder %s75, %s76
      %p88 = scmp.eq.s32.totalorder %s24, 1
      %p89 = por %p87, %p88
      %p91 = scmp.ne.s32.totalorder %s76, %s90
      %p92 = scmp.eq.s32.totalorder %s24, 0
      %p93 = por %p91, %p92
      %s95 = sadd.s32 %s94, 1
      %p98 = scmp.eq.s32.totalorder %s18, 1
      %p99 = scmp.ne.s32.totalorder %s94, %s96
      %p100 = scmp.eq.s32.totalorder %s18, 0
      %p101 = por %p99, %p100
      %p102 = scmp.ne.s32.totalorder %s94, %s96
      %p103 = scmp.eq.s32.totalorder %s23, 1
      %p104 = por %p102, %p103
      %p105 = scmp.ne.s32.totalorder %s96, %s97
      %p106 = scmp.eq.s32.totalorder %s23, 0
      %p107 = por %p105, %p106
      %p108 = scmp.ne.s32.totalorder %s96, %s97
      %p109 = scmp.eq.s32.totalorder %s24, 1
      %p110 = por %p108, %p109
      %p112 = scmp.ne.s32.totalorder %s97, %s111
      %p113 = scmp.eq.s32.totalorder %s24, 0
      %p114 = por %p112, %p113
      %s116 = sadd.s32 %s115, 1
      %p119 = scmp.eq.s32.totalorder %s18, 1
      %p120 = scmp.ne.s32.totalorder %s115, %s117
      %p121 = scmp.eq.s32.totalorder %s18, 0
      %p122 = por %p120, %p121
      %p123 = scmp.ne.s32.totalorder %s115, %s117
      %p124 = scmp.eq.s32.totalorder %s23, 1
      %p125 = por %p123, %p124
      %p126 = scmp.ne.s32.totalorder %s117, %s118
      %p127 = scmp.eq.s32.totalorder %s23, 0
      %p128 = por %p126, %p127
      %p129 = scmp.ne.s32.totalorder %s117, %s118
      %p130 = scmp.eq.s32.totalorder %s24, 1
      %p131 = por %p129, %p130
      %p133 = scmp.ne.s32.totalorder %s118, %s132
      %p134 = scmp.eq.s32.totalorder %s24, 0
      %p135 = por %p133, %p134
      %s136 = ssub.s32 %s18, %s25
      %p137 = scmp.eq.s32.totalorder %s136, 0
      %s139 = sadd.s32 %s138, 1
      %s140 = scalar_select %p137, %s138, %s139
      %p143 = pneg %p137
      %p144 = scmp.eq.s32.totalorder %s18, 1
      %p145 = por %p143, %p144
      %p146 = scmp.ne.s32.totalorder %s138, %s141
      %p147 = scmp.eq.s32.totalorder %s18, 0
      %p148 = por %p146, %p147
      %p149 = scmp.ne.s32.totalorder %s138, %s141
      %p150 = scmp.eq.s32.totalorder %s23, 1
      %p151 = por %p149, %p150
      %p152 = scmp.ne.s32.totalorder %s141, %s142
      %p153 = scmp.eq.s32.totalorder %s23, 0
      %p154 = por %p152, %p153
      %p155 = scmp.ne.s32.totalorder %s141, %s142
      %p156 = scmp.eq.s32.totalorder %s24, 1
      %p157 = por %p155, %p156
      %p159 = scmp.ne.s32.totalorder %s142, %s158
      %p160 = scmp.eq.s32.totalorder %s24, 0
      %p161 = por %p159, %p160
      %p162 = scmp.le.s32.totalorder 1, %s18
      %p163 = scmp.lt.s32.totalorder %s18, 3
      %p164 = pnand %p162, %p163
      %p165 = pneg %p164
      // Predicated region
      $region9: #{tpu_custom_call.1} parent=5 // pred_check
        _
      $region10: #{tpu_custom_call.1} parent=5 // pred_check_branch
        %167 = sbr.rel (%p164) target = $region12
      $region11: #{tpu_custom_call.1} parent=5 // pred_region
        %s168 = ssub.s32 %s18, 1
        // Predicated region
        $region13: #{tpu_custom_call.1} parent=11 // pred_check
          %p169 = pneg %p65
        $region14: #{tpu_custom_call.1} parent=11 // pred_check_branch
          %171 = sbr.rel (%p169) target = $region16
        $region15: #{tpu_custom_call.1} parent=11 // pred_region
          %173 = vsyncadd [#allocation6], 0
          %s174 = sshll.u32 %s1, 4
          %s175 = int_to_ptr.hbm [resolvable:$true] %s174
          %s176 = sshll.u32 [#allocation5], 4
          %s177 = int_to_ptr.vmem [resolvable:$true] %s176
          %182 = dma.hbm_to_vmem [thread:$0]  %s175, 2048, %s177, [#allocation6], 128, 128, 8
        $region16: #{tpu_custom_call.1} parent=11 // pred_fallthru
          _
        // Predicated region
        $region17: #{tpu_custom_call.1} parent=11 // pred_check
          %p183 = pneg %p86
        $region18: #{tpu_custom_call.1} parent=11 // pred_check_branch
          %185 = sbr.rel (%p183) target = $region20
        $region19: #{tpu_custom_call.1} parent=11 // pred_region
          _
        $region20: #{tpu_custom_call.1} parent=11 // pred_fallthru
          _
        // Predicated region
        $region21: #{tpu_custom_call.1} parent=11 // pred_check
          %p186 = pneg %p107
        $region22: #{tpu_custom_call.1} parent=11 // pred_check_branch
          %188 = sbr.rel (%p186) target = $region24
        $region23: #{tpu_custom_call.1} parent=11 // pred_region
          %190 = vsyncadd [#allocation6], 0
          %s191 = sshll.u32 %s3, 4
          %s192 = int_to_ptr.hbm [resolvable:$true] %s191
          %s193 = sshll.u32 [#allocation7], 4
          %s194 = int_to_ptr.vmem [resolvable:$true] %s193
          %199 = dma.hbm_to_vmem [thread:$0]  %s192, 2048, %s194, [#allocation6], 128, 128, 8
        $region24: #{tpu_custom_call.1} parent=11 // pred_fallthru
          _
        // Predicated region
        $region25: #{tpu_custom_call.1} parent=11 // pred_check
          %p200 = pneg %p128
        $region26: #{tpu_custom_call.1} parent=11 // pred_check_branch
          %202 = sbr.rel (%p200) target = $region28
        $region27: #{tpu_custom_call.1} parent=11 // pred_region
          _
        $region28: #{tpu_custom_call.1} parent=11 // pred_fallthru
          _
      $region12: #{tpu_custom_call.1} parent=5 // pred_fallthru
        _
      %p203 = scmp.lt.s32.totalorder %s18, 2
      // Predicated region
      $region29: #{tpu_custom_call.1} parent=5 // pred_check
        %p204 = pneg %p203
      $region30: #{tpu_custom_call.1} parent=5 // pred_check_branch
        %206 = sbr.rel (%p204) target = $region32
      $region31: #{tpu_custom_call.1} parent=5 // pred_region
        // Predicated region
        $region33: #{tpu_custom_call.1} parent=31 // pred_check
          %p207 = pneg %p38
        $region34: #{tpu_custom_call.1} parent=31 // pred_check_branch
          %209 = sbr.rel (%p207) target = $region36
        $region35: #{tpu_custom_call.1} parent=31 // pred_region
          %s210 = sand.u32 %s28, 1
          %s211 = scalar_lea.sflag [#allocation3], %s210
          %s212 = sand.u32 %s28, 1
          %s213 = smul.addr %s212, 8
          %s214 = scalar_lea.vmem [#allocation2], %s213
          %216 = vsyncadd %s211, 0
          %s217 = smul.addr %s18, 8
          %s218 = scalar_lea.hbm %s0, %s217
          %s220 = sshll.u32 %s218, 4
          %s221 = int_to_ptr.hbm [resolvable:$true] %s220
          %s222 = sshll.u32 %s214, 4
          %s223 = int_to_ptr.vmem [resolvable:$true] %s222
          %225 = dma.hbm_to_vmem [thread:$0]  %s221, 128, %s223, %s211
        $region36: #{tpu_custom_call.1} parent=31 // pred_fallthru
          _
      $region32: #{tpu_custom_call.1} parent=5 // pred_fallthru
        _
      %p226 = scmp.le.s32.totalorder 1, %s18
      %p227 = scmp.lt.s32.totalorder %s18, 3
      %p228 = pnand %p226, %p227
      %p229 = pneg %p228
      // Predicated region
      $region37: #{tpu_custom_call.1} parent=5 // pred_check
        _
      $region38: #{tpu_custom_call.1} parent=5 // pred_check_branch
        %231 = sbr.rel (%p228) target = $region40
      $region39: #{tpu_custom_call.1} parent=5 // pred_region
        %s232 = ssub.s32 %s18, 1
        %s233 = sand.u32 %s31, 1
        %s234 = scalar_lea.sflag [#allocation3], %s233
        %s235 = sand.u32 %s31, 1
        %s236 = smul.addr %s235, 8
        %s237 = scalar_lea.vmem [#allocation2], %s236
        // Predicated region
        $region41: #{tpu_custom_call.1} parent=39 // pred_check
          %p238 = pneg %p44
        $region42: #{tpu_custom_call.1} parent=39 // pred_check_branch
          %240 = sbr.rel (%p238) target = $region44
        $region43: #{tpu_custom_call.1} parent=39 // pred_region
          %242 = dma.done %s234, 128
        $region44: #{tpu_custom_call.1} parent=39 // pred_fallthru
          _
        // Predicated region
        $region45: #{tpu_custom_call.1} parent=39 // pred_check
          %p243 = pneg %p65
        $region46: #{tpu_custom_call.1} parent=39 // pred_check_branch
          %245 = sbr.rel (%p243) target = $region48
        $region47: #{tpu_custom_call.1} parent=39 // pred_region
          %247 = dma.done [#allocation6], 2048
        $region48: #{tpu_custom_call.1} parent=39 // pred_fallthru
          _
        // Predicated region
        $region49: #{tpu_custom_call.1} parent=39 // pred_check
          %p248 = pneg %p107
        $region50: #{tpu_custom_call.1} parent=39 // pred_check_branch
          %250 = sbr.rel (%p248) target = $region52
        $region51: #{tpu_custom_call.1} parent=39 // pred_region
          %252 = dma.done [#allocation6], 2048
        $region52: #{tpu_custom_call.1} parent=39 // pred_fallthru
          _
        %s253 = sand.u32 %s31, 1
        %s254 = scalar_lea.sflag [#allocation3], %s253
        %s255 = sand.u32 %s31, 1
        %s256 = smul.addr %s255, 8
        %s257 = scalar_lea.vmem [#allocation2], %s256
        %p258 = pneg %p44
        %p259 = pneg %p41
        %p260 = pneg %p65
        %p261 = pneg %p62
        %p262 = pneg %p86
        %p263 = pneg %p83
        %p264 = pneg %p107
        %p265 = pneg %p104
        %p266 = pneg %p128
        %p267 = pneg %p125
        %p268 = pneg %p154
        %p269 = pneg %p151
        %s270 = sand.u32 %s141, 1
        %s271 = scalar_lea.sflag [#allocation4], %s270
        %s272 = sand.u32 %s141, 1
        %s273 = smul.addr %s272, 8
        %s274 = scalar_lea.vmem [#allocation8], %s273
        %v275 = vld [vmem:[%s237] sm:$0xff]
        %v276 = vld [vmem:[#allocation5] sm:$0xff]
        %v277 = vld [vmem:[#allocation5 + $0x8] sm:$0xff]
        %v278 = vld [vmem:[#allocation5 + $0x10] sm:$0xff]
        %v279 = vld [vmem:[#allocation5 + $0x18] sm:$0xff]
        %v280 = vld [vmem:[#allocation5 + $0x20] sm:$0xff]
        %v281 = vld [vmem:[#allocation5 + $0x28] sm:$0xff]
        %v282 = vld [vmem:[#allocation5 + $0x30] sm:$0xff]
        %v283 = vld [vmem:[#allocation5 + $0x38] sm:$0xff]
        %v284 = vld [vmem:[#allocation5 + $0x40] sm:$0xff]
        %v285 = vld [vmem:[#allocation5 + $0x48] sm:$0xff]
        %v286 = vld [vmem:[#allocation5 + $0x50] sm:$0xff]
        %v287 = vld [vmem:[#allocation5 + $0x58] sm:$0xff]
        %v288 = vld [vmem:[#allocation5 + $0x60] sm:$0xff]
        %v289 = vld [vmem:[#allocation5 + $0x68] sm:$0xff]
        %v290 = vld [vmem:[#allocation5 + $0x70] sm:$0xff]
        %v291 = vld [vmem:[#allocation5 + $0x78] sm:$0xff]
        %v292 = vld [vmem:[%s2] sm:$0x1]
        %v294 = vperm.slane %v292, 0
        %296 = vmatpush.msra.mxu0 %v291
        %297 = vmatpush.msra.mxu0 %v290
        %298 = vmatpush.msra.mxu0 %v289
        %299 = vmatpush.msra.mxu0 %v288
        %300 = vmatpush.msra.mxu0 %v287
        %301 = vmatpush.msra.mxu0 %v286
        %302 = vmatpush.msra.mxu0 %v285
        %303 = vmatpush.msra.mxu0 %v284
        %304 = vmatpush.msra.mxu0 %v283
        %305 = vmatpush.msra.mxu0 %v282
        %306 = vmatpush.msra.mxu0 %v281
        %307 = vmatpush.msra.mxu0 %v280
        %308 = vmatpush.msra.mxu0 %v279
        %309 = vmatpush.msra.mxu0 %v278
        %310 = vmatpush.msra.mxu0 %v277
        %311 = vmatpush.msra.mxu0 %v276
        %312 = vmatmul.f32.gmra.mxu0 %v275
        %v313 = vpop.f32.mrf.mxu0
        %v314 = vadd.f32 %v294, %v313
        %315 = vdwg.mxu0
        %v316 = vmax.f32 %v314, 0.0
        %v317 = vld [vmem:[#allocation7] sm:$0xff]
        %v318 = vld [vmem:[#allocation7 + $0x8] sm:$0xff]
        %v319 = vld [vmem:[#allocation7 + $0x10] sm:$0xff]
        %v320 = vld [vmem:[#allocation7 + $0x18] sm:$0xff]
        %v321 = vld [vmem:[#allocation7 + $0x20] sm:$0xff]
        %v322 = vld [vmem:[#allocation7 + $0x28] sm:$0xff]
        %v323 = vld [vmem:[#allocation7 + $0x30] sm:$0xff]
        %v324 = vld [vmem:[#allocation7 + $0x38] sm:$0xff]
        %v325 = vld [vmem:[#allocation7 + $0x40] sm:$0xff]
        %v326 = vld [vmem:[#allocation7 + $0x48] sm:$0xff]
        %v327 = vld [vmem:[#allocation7 + $0x50] sm:$0xff]
        %v328 = vld [vmem:[#allocation7 + $0x58] sm:$0xff]
        %v329 = vld [vmem:[#allocation7 + $0x60] sm:$0xff]
        %v330 = vld [vmem:[#allocation7 + $0x68] sm:$0xff]
        %v331 = vld [vmem:[#allocation7 + $0x70] sm:$0xff]
        %v332 = vld [vmem:[#allocation7 + $0x78] sm:$0xff]
        %v333 = vld [vmem:[%s4] sm:$0x1]
        %v335 = vperm.slane %v333, 0
        %337 = vmatpush.msra.mxu0 %v332
        %338 = vmatpush.msra.mxu0 %v331
        %339 = vmatpush.msra.mxu0 %v330
        %340 = vmatpush.msra.mxu0 %v329
        %341 = vmatpush.msra.mxu0 %v328
        %342 = vmatpush.msra.mxu0 %v327
        %343 = vmatpush.msra.mxu0 %v326
        %344 = vmatpush.msra.mxu0 %v325
        %345 = vmatpush.msra.mxu0 %v324
        %346 = vmatpush.msra.mxu0 %v323
        %347 = vmatpush.msra.mxu0 %v322
        %348 = vmatpush.msra.mxu0 %v321
        %349 = vmatpush.msra.mxu0 %v320
        %350 = vmatpush.msra.mxu0 %v319
        %351 = vmatpush.msra.mxu0 %v318
        %352 = vmatpush.msra.mxu0 %v317
        %353 = vmatmul.f32.gmra.mxu0 %v316
        %v354 = vpop.f32.mrf.mxu0
        %v355 = vadd.f32 %v335, %v354
        %356 = vdwg.mxu0
        %v357 = vadd.f32 %v355, %v275
        %v358 = vmax.f32 %v357, 0.0
        %359 = vst [vmem:[%s274] sm:$0xff] %v358
        %s360 = sand.u32 %s141, 1
        %s361 = scalar_lea.sflag [#allocation4], %s360
        %s362 = sand.u32 %s141, 1
        %s363 = smul.addr %s362, 8
        %s364 = scalar_lea.vmem [#allocation8], %s363
        // Predicated region
        $region53: #{tpu_custom_call.1} parent=39 // pred_check
          %p365 = pneg %p151
        $region54: #{tpu_custom_call.1} parent=39 // pred_check_branch
          %367 = sbr.rel (%p365) target = $region56
        $region55: #{tpu_custom_call.1} parent=39 // pred_region
          %369 = vsyncadd %s361, 0
          %s370 = smul.addr %s23, 8
          %s371 = scalar_lea.hbm %s5, %s370
          %s373 = sshll.u32 %s364, 4
          %s374 = int_to_ptr.vmem [resolvable:$true] %s373
          %s375 = sshll.u32 %s371, 4
          %s376 = int_to_ptr.hbm [resolvable:$true] %s375
          %378 = dma.vmem_to_hbm [thread:$0]  %s374, 128, %s376, %s361
        $region56: #{tpu_custom_call.1} parent=39 // pred_fallthru
          _
      $region40: #{tpu_custom_call.1} parent=5 // pred_fallthru
        _
      %p379 = scmp.le.s32.totalorder 2, %s18
      // Predicated region
      $region57: #{tpu_custom_call.1} parent=5 // pred_check
        %p380 = pneg %p379
      $region58: #{tpu_custom_call.1} parent=5 // pred_check_branch
        %382 = sbr.rel (%p380) target = $region60
      $region59: #{tpu_custom_call.1} parent=5 // pred_region
        %s383 = ssub.s32 %s18, 2
        // Predicated region
        $region61: #{tpu_custom_call.1} parent=59 // pred_check
          %p384 = pneg %p157
        $region62: #{tpu_custom_call.1} parent=59 // pred_check_branch
          %386 = sbr.rel (%p384) target = $region64
        $region63: #{tpu_custom_call.1} parent=59 // pred_region
          %s387 = sand.u32 %s142, 1
          %s388 = scalar_lea.sflag [#allocation4], %s387
          %s389 = sand.u32 %s142, 1
          %s390 = smul.addr %s389, 8
          %s391 = scalar_lea.vmem [#allocation8], %s390
          %393 = dma.done %s388, 128
        $region64: #{tpu_custom_call.1} parent=59 // pred_fallthru
          _
      $region60: #{tpu_custom_call.1} parent=5 // pred_fallthru
        _
    $region6: #{tpu_custom_call.1} parent=1 // loop_footer
      %s22 = sadd.s32 1, %s18
    $region7: #{tpu_custom_call.1} parent=1 // loop_footer_branch
      %17 = sbr.rel target = $region3
    $region8: #{tpu_custom_call.1} parent=1 // loop_exit
      _
    %394 = vsyncpa [#allocation3], 1
    %s395 = scalar_lea.sflag [#allocation3], 1
    %396 = vsyncpa %s395, 1
    %397 = vsyncpa [#allocation6], 1
    %398 = vsyncpa [#allocation4], 1
    %s399 = scalar_lea.sflag [#allocation4], 1
    %400 = vsyncpa %s399, 1

</llo_original>
